<compile_context>
chip_gen: v7x
topology: tpu7x:2x2x1
jax: 0.10.0
libtpu: 0.0.40
codegen_flags: <defaults>
</compile_context>

<pallas_src>
import functools

import jax
import jax.numpy as jnp
import numpy as np
from jax.experimental import pallas as pl
from jax.experimental.pallas import tpu as pltpu


def _round_up(a, b):
    return (a + b - 1) // b * b


def _vmem_budget_bytes():
    """~80% of physical per-core VMEM; 64 MiB-class (v7x-safe) fallback."""
    try:
        cap = int(pltpu.get_tpu_info().vmem_capacity_bytes)
    except Exception:
        cap = 64 << 20
    return max(32 << 20, int(cap * 0.80))


# --------------------------------------------------------------------------
# Kernel A: output projection + LayerNorm.   grid = (row_tiles,)
# --------------------------------------------------------------------------
def _input_proj_ln_kernel(x_ref, wout_ref, bout_ref, gamma_ref, beta_ref,
                          h_ref, *, eps):
    """x_ref:(TN,clip) in x dtype; wout:(clip,phi) bf16; bias/LN params f32;
    h_ref:(TN,phi) f32 normalized hidden state."""
    x = x_ref[...].astype(jnp.bfloat16)          # cast folded into the kernel
    h = jnp.dot(x, wout_ref[...], preferred_element_type=jnp.float32)   # MXU
    h = h + bout_ref[...]
    mu = jnp.mean(h, axis=-1, keepdims=True)
    var = jnp.mean((h - mu) * (h - mu), axis=-1, keepdims=True)
    h = (h - mu) * jax.lax.rsqrt(var + eps)
    h_ref[...] = h * gamma_ref[...] + beta_ref[...]


# --------------------------------------------------------------------------
# Kernel B: 6x residual MLP blocks.   grid = (row_tiles [parallel], L [arbitrary])
# The f32 output block (constant index along the layer axis) IS the residual
# stream accumulator; one layer's weights are streamed per grid step.
# --------------------------------------------------------------------------
def _residual_mlp_kernel(h_ref, w1_ref, b1_ref, w2_ref, b2_ref, o_ref):
    layer = pl.program_id(1)

    @pl.when(layer == 0)
    def _init():
        o_ref[...] = h_ref[...]

    h = o_ref[...]                                           # f32 residual stream
    t = jnp.dot(h.astype(jnp.bfloat16), w1_ref[0],
                preferred_element_type=jnp.float32) + b1_ref[0]
    t = jax.nn.gelu(t, approximate=False)                    # exact erf == nn.GELU()
    t = jnp.dot(t.astype(jnp.bfloat16), w2_ref[0],
                preferred_element_type=jnp.float32) + b2_ref[0]
    o_ref[...] = h + t


def projections_forward(x, params, *, row_tile=768, eps=1e-5, out_dtype=None):
    """x: (B, S, clip_embed) -> (B, S, phi_embed). Heavy compute in Pallas."""
    B, S, clip_embed = x.shape
    w_out = params["w_out"]                                   # (clip, phi)
    phi = w_out.shape[1]
    L = params["w1"].shape[0]
    out_dtype = out_dtype or x.dtype
    N = B * S
    x_bytes = jnp.dtype(x.dtype).itemsize

    vmem_limit = _vmem_budget_bytes()

    # ---- row-tile sizing against the per-chip VMEM budget -------------------
    # Kernel B per-step fixed cost: double-buffered (w1+w2) bf16 blocks.
    fixed_b = 8 * phi * phi + 4 * 4 * phi
    per_row_b = 28 * phi                       # 2x h-in + 2x out (f32) + temporaries
    # Kernel A fixed: double-buffered w_out bf16 (+ small LN params).
    fixed_a = 4 * clip_embed * phi + 6 * 4 * _round_up(phi, 128)
    per_row_a = (2 * x_bytes + 2) * clip_embed + 16 * phi

    tn_cap_b = max((vmem_limit - fixed_b) // per_row_b, 16)
    tn_cap_a = max((vmem_limit - fixed_a) // per_row_a, 16)
    # TODO(synk): for very large phi_embed on v7x (8*phi^2 ~ VMEM budget) tile
    # w1/w2 along the output-feature dim instead of only shrinking the row tile.
    tn = min(int(row_tile), int(tn_cap_a), int(tn_cap_b))
    tn = min(tn, max(16, _round_up(pl.cdiv(N, 2), 16)))   # >=2 row tiles (megacore)
    tn = max(16, (tn // 16) * 16)

    N_pad = _round_up(N, tn)
    grid_rows = N_pad // tn

    x2 = x.reshape(N, clip_embed)
    if N_pad != N:
        x2 = jnp.pad(x2, ((0, N_pad - N), (0, 0)))

    # bf16 weights for MXU / HBM traffic; f32 biases and LayerNorm params.
    w_out_b = w_out.astype(jnp.bfloat16)
    w1_b = params["w1"].astype(jnp.bfloat16)
    w2_b = params["w2"].astype(jnp.bfloat16)
    b_out = params["b_out"].astype(jnp.float32)
    gamma = params["gamma"].astype(jnp.float32)
    beta = params["beta"].astype(jnp.float32)
    b1 = params["b1"].astype(jnp.float32)
    b2 = params["b2"].astype(jnp.float32)

    # ---- phase A: input projection + LayerNorm ------------------------------
    h = pl.pallas_call(
        functools.partial(_input_proj_ln_kernel, eps=eps),
        out_shape=jax.ShapeDtypeStruct((N_pad, phi), jnp.float32),
        grid_spec=pltpu.PrefetchScalarGridSpec(
            num_scalar_prefetch=0,
            grid=(grid_rows,),
            in_specs=[
                pl.BlockSpec((tn, clip_embed), lambda i: (i, 0)),        # x rows
                pl.BlockSpec((clip_embed, phi), lambda i: (0, 0)),       # w_out
                pl.BlockSpec((1, phi), lambda i: (0, 0)),                # b_out
                pl.BlockSpec((1, phi), lambda i: (0, 0)),                # gamma
                pl.BlockSpec((1, phi), lambda i: (0, 0)),                # beta
            ],
            out_specs=pl.BlockSpec((tn, phi), lambda i: (i, 0)),
        ),
        compiler_params=pltpu.CompilerParams(
            dimension_semantics=("parallel",),
            vmem_limit_bytes=int(vmem_limit)),
        cost_estimate=pl.CostEstimate(
            flops=int(2 * N_pad * clip_embed * phi),
            transcendentals=int(N_pad),
            bytes_accessed=int(N_pad * clip_embed * x_bytes
                               + clip_embed * phi * 2 + N_pad * phi * 4)),
    )(x2, w_out_b, b_out, gamma, beta)

    # ---- phase B: residual MLP stack, one layer's weights per grid step -----
    out2 = pl.pallas_call(
        _residual_mlp_kernel,
        out_shape=jax.ShapeDtypeStruct((N_pad, phi), jnp.float32),
        grid_spec=pltpu.PrefetchScalarGridSpec(
            num_scalar_prefetch=0,
            grid=(grid_rows, L),                              # layer axis innermost
            in_specs=[
                pl.BlockSpec((tn, phi), lambda i, l: (i, 0)),             # h rows
                pl.BlockSpec((1, phi, phi), lambda i, l: (l, 0, 0)),      # w1[l]
                pl.BlockSpec((1, 1, phi), lambda i, l: (l, 0, 0)),        # b1[l]
                pl.BlockSpec((1, phi, phi), lambda i, l: (l, 0, 0)),      # w2[l]
                pl.BlockSpec((1, 1, phi), lambda i, l: (l, 0, 0)),        # b2[l]
            ],
            out_specs=pl.BlockSpec((tn, phi), lambda i, l: (i, 0)),
        ),
        compiler_params=pltpu.CompilerParams(
            dimension_semantics=("parallel", "arbitrary"),
            vmem_limit_bytes=int(vmem_limit)),
        cost_estimate=pl.CostEstimate(
            flops=int(4 * N_pad * L * phi * phi),
            transcendentals=int(N_pad * L * phi),
            bytes_accessed=int(grid_rows * L * 2 * phi * phi * 2
                               + 2 * N_pad * phi * 4 + L * 2 * phi * 4)),
    )(h, w1_b, b1, w2_b, b2)

    out = out2[:N].reshape(B, S, phi)
    if out.dtype != out_dtype:
        out = out.astype(out_dtype)
    return out


def init_params(key, clip_embed, phi_embed, num_layers):
    """Deterministic synthetic f32 parameters (shapes per Projections.__init__)."""
    ks = jax.random.split(key, 6)
    scale_o = 1.0 / np.sqrt(clip_embed)
    scale_p = 1.0 / np.sqrt(phi_embed)
    return {
        "w_out": jax.random.uniform(ks[0], (clip_embed, phi_embed), jnp.float32,
                                    -scale_o, scale_o),
        "b_out": jax.random.uniform(ks[1], (1, phi_embed), jnp.float32,
                                    -scale_o, scale_o),
        "gamma": jnp.ones((1, phi_embed), jnp.float32),
        "beta": jnp.zeros((1, phi_embed), jnp.float32),
        "w1": jax.random.uniform(ks[2], (num_layers, phi_embed, phi_embed),
                                 jnp.float32, -scale_p, scale_p),
        "b1": jax.random.uniform(ks[3], (num_layers, 1, phi_embed),
                                 jnp.float32, -scale_p, scale_p),
        "w2": jax.random.uniform(ks[4], (num_layers, phi_embed, phi_embed),
                                 jnp.float32, -scale_p, scale_p),
        "b2": jax.random.uniform(ks[5], (num_layers, 1, phi_embed),
                                 jnp.float32, -scale_p, scale_p),
    }


def projections_reference(x, params, eps=1e-5, matmul_dtype=jnp.float32):
    """Pure-JAX reference matching the PyTorch forward semantics.

    matmul_dtype=bfloat16 mimics the kernel's mixed-precision matmul policy
    (bf16 operands, f32 accumulation, f32 everything else)."""
    def mm(a, w):
        return jnp.dot(a.astype(matmul_dtype), w.astype(matmul_dtype),
                       preferred_element_type=jnp.float32)

    h = mm(x, params["w_out"]) + params["b_out"][0]
    mu = jnp.mean(h, axis=-1, keepdims=True)
    var = jnp.mean((h - mu) ** 2, axis=-1, keepdims=True)
    h = (h - mu) * jax.lax.rsqrt(var + eps)
    h = h * params["gamma"][0] + params["beta"][0]
    for l in range(params["w1"].shape[0]):
        t = mm(h, params["w1"][l]) + params["b1"][l, 0]
        t = jax.nn.gelu(t, approximate=False)
        t = mm(t, params["w2"][l]) + params["b2"][l, 0]
        h = h + t
    return h


if __name__ == "__main__":
    # Small lane-aligned shapes: batch=2, seq=128, clip_embed=128, phi_embed=128.
    # N=256 rows -> the ceil(N/2) megacore cap gives tn=128 and grid=(2, 6):
    # exercises row pipelining (parallel axis) and per-layer weight streaming.
    B, S, CLIP, PHI, L = 2, 128, 128, 128, 6
    key = jax.random.PRNGKey(0)
    k_x, k_p = jax.random.split(key)

    x = jax.random.normal(k_x, (B, S, CLIP), jnp.float32)
    params = init_params(k_p, CLIP, PHI, L)

    out = projections_forward(x, params)
    out = jax.block_until_ready(out)

    # Tight check against a reference using the same bf16-matmul policy.
    ref_bf16 = projections_reference(x, params, matmul_dtype=jnp.bfloat16)
    np.testing.assert_allclose(np.asarray(out), np.asarray(ref_bf16),
                               rtol=2e-3, atol=2e-3)

    # Loose check against the full-f32 module semantics (bf16 matmul rounding only).
    ref_f32 = projections_reference(x, params, matmul_dtype=jnp.float32)
    np.testing.assert_allclose(np.asarray(out), np.asarray(ref_f32),
                               rtol=5e-2, atol=5e-2)

    print("KERNEL_OK")
</pallas_src>

<mosaic_0001>
module attributes {stable_mosaic.version = 11 : i64} {
  func.func @_input_proj_ln_kernel(%arg0: i32, %arg1: memref<128x128xf32, #tpu.memory_space<vmem>>, %arg2: memref<128x128xbf16, #tpu.memory_space<vmem>>, %arg3: memref<1x128xf32, #tpu.memory_space<vmem>>, %arg4: memref<1x128xf32, #tpu.memory_space<vmem>>, %arg5: memref<1x128xf32, #tpu.memory_space<vmem>>, %arg6: memref<128x128xf32, #tpu.memory_space<vmem>>) attributes {dimension_semantics = [#tpu.dimension_semantics<parallel>], iteration_bounds = array<i64: 2>, scalar_prefetch = 0 : i64, scratch_operands = 0 : i64, tpu.core_type = #tpu.core_type<tc>, window_params = [{transform_indices = @transform_0, window_bounds = array<i64: 128, 128>}, {pipeline_mode = #tpu.pipeline_mode<synchronous>, transform_indices = @transform_1, window_bounds = array<i64: 128, 128>}, {pipeline_mode = #tpu.pipeline_mode<synchronous>, transform_indices = @transform_2, window_bounds = array<i64: 1, 128>}, {pipeline_mode = #tpu.pipeline_mode<synchronous>, transform_indices = @transform_3, window_bounds = array<i64: 1, 128>}, {pipeline_mode = #tpu.pipeline_mode<synchronous>, transform_indices = @transform_4, window_bounds = array<i64: 1, 128>}, {transform_indices = @transform_5, window_bounds = array<i64: 128, 128>}]} {
    %c0 = arith.constant 0 : index
    %c0_0 = arith.constant 0 : index
    %0 = vector.load %arg1[%c0, %c0_0] : memref<128x128xf32, #tpu.memory_space<vmem>>, vector<128x128xf32>
    %1 = arith.truncf %0 : vector<128x128xf32> to vector<128x128xbf16>
    %c0_1 = arith.constant 0 : index
    %c0_2 = arith.constant 0 : index
    %2 = vector.load %arg2[%c0_1, %c0_2] : memref<128x128xbf16, #tpu.memory_space<vmem>>, vector<128x128xbf16>
    %cst = arith.constant dense<0.000000e+00> : vector<128x128xf32>
    %3 = tpu.matmul %1, %2, %cst {dimension_numbers = #tpu.dot_dimension_numbers<[1], [0], [0], [1], [0, 0, 1, 1], [], []>} : vector<128x128xbf16>, vector<128x128xbf16>, vector<128x128xf32> -> vector<128x128xf32>
    %c0_3 = arith.constant 0 : index
    %c0_4 = arith.constant 0 : index
    %4 = vector.load %arg3[%c0_3, %c0_4] : memref<1x128xf32, #tpu.memory_space<vmem>>, vector<1x128xf32>
    %5 = vector.broadcast %4 : vector<1x128xf32> to vector<128x128xf32>
    %6 = arith.addf %3, %5 : vector<128x128xf32>
    %cst_5 = arith.constant dense<0.000000e+00> : vector<128xf32>
    %7 = vector.multi_reduction <add>, %6, %cst_5 [1] : vector<128x128xf32> to vector<128xf32>
    %8 = vector.shape_cast %7 : vector<128xf32> to vector<128x1xf32>
    %cst_6 = arith.constant 1.280000e+02 : f32
    %9 = vector.broadcast %cst_6 : f32 to vector<128x1xf32>
    %10 = arith.divf %8, %9 : vector<128x1xf32>
    %11 = vector.broadcast %10 : vector<128x1xf32> to vector<128x128xf32>
    %12 = arith.subf %6, %11 : vector<128x128xf32>
    %13 = vector.broadcast %10 : vector<128x1xf32> to vector<128x128xf32>
    %14 = arith.subf %6, %13 : vector<128x128xf32>
    %15 = arith.mulf %12, %14 : vector<128x128xf32>
    %cst_7 = arith.constant dense<0.000000e+00> : vector<128xf32>
    %16 = vector.multi_reduction <add>, %15, %cst_7 [1] : vector<128x128xf32> to vector<128xf32>
    %17 = vector.shape_cast %16 : vector<128xf32> to vector<128x1xf32>
    %cst_8 = arith.constant 1.280000e+02 : f32
    %18 = vector.broadcast %cst_8 : f32 to vector<128x1xf32>
    %19 = arith.divf %17, %18 : vector<128x1xf32>
    %20 = vector.broadcast %10 : vector<128x1xf32> to vector<128x128xf32>
    %21 = arith.subf %6, %20 : vector<128x128xf32>
    %cst_9 = arith.constant 9.99999974E-6 : f32
    %22 = vector.broadcast %cst_9 : f32 to vector<128x1xf32>
    %23 = arith.addf %19, %22 : vector<128x1xf32>
    %24 = math.rsqrt %23 : vector<128x1xf32>
    %25 = vector.broadcast %24 : vector<128x1xf32> to vector<128x128xf32>
    %26 = arith.mulf %21, %25 : vector<128x128xf32>
    %c0_10 = arith.constant 0 : index
    %c0_11 = arith.constant 0 : index
    %27 = vector.load %arg4[%c0_10, %c0_11] : memref<1x128xf32, #tpu.memory_space<vmem>>, vector<1x128xf32>
    %28 = vector.broadcast %27 : vector<1x128xf32> to vector<128x128xf32>
    %29 = arith.mulf %26, %28 : vector<128x128xf32>
    %c0_12 = arith.constant 0 : index
    %c0_13 = arith.constant 0 : index
    %30 = vector.load %arg5[%c0_12, %c0_13] : memref<1x128xf32, #tpu.memory_space<vmem>>, vector<1x128xf32>
    %31 = vector.broadcast %30 : vector<1x128xf32> to vector<128x128xf32>
    %32 = arith.addf %29, %31 : vector<128x128xf32>
    %c0_14 = arith.constant 0 : index
    %c0_15 = arith.constant 0 : index
    %33 = vector.load %arg6[%c0_14, %c0_15] : memref<128x128xf32, #tpu.memory_space<vmem>>, vector<128x128xf32>
    tpu.vector_store %arg6[%c0_14, %c0_15], %32 {strides = array<i32>} : memref<128x128xf32, #tpu.memory_space<vmem>>, vector<128x128xf32>,
    return
  }
  func.func @transform_0(%arg0: i32) -> (i32, i32) {
    %c0_i32 = arith.constant 0 : i32
    %c0_i32_0 = arith.constant 0 : i32
    return %arg0, %c0_i32 : i32, i32
  }
  func.func @transform_1(%arg0: i32) -> (i32, i32) {
    %c0_i32 = arith.constant 0 : i32
    %c0_i32_0 = arith.constant 0 : i32
    %c0_i32_1 = arith.constant 0 : i32
    return %c0_i32, %c0_i32_0 : i32, i32
  }
  func.func @transform_2(%arg0: i32) -> (i32, i32) {
    %c0_i32 = arith.constant 0 : i32
    %c0_i32_0 = arith.constant 0 : i32
    %c0_i32_1 = arith.constant 0 : i32
    return %c0_i32, %c0_i32_0 : i32, i32
  }
  func.func @transform_3(%arg0: i32) -> (i32, i32) {
    %c0_i32 = arith.constant 0 : i32
    %c0_i32_0 = arith.constant 0 : i32
    %c0_i32_1 = arith.constant 0 : i32
    return %c0_i32, %c0_i32_0 : i32, i32
  }
  func.func @transform_4(%arg0: i32) -> (i32, i32) {
    %c0_i32 = arith.constant 0 : i32
    %c0_i32_0 = arith.constant 0 : i32
    %c0_i32_1 = arith.constant 0 : i32
    return %c0_i32, %c0_i32_0 : i32, i32
  }
  func.func @transform_5(%arg0: i32) -> (i32, i32) {
    %c0_i32 = arith.constant 0 : i32
    %c0_i32_0 = arith.constant 0 : i32
    return %arg0, %c0_i32 : i32, i32
  }
}

</mosaic_0001>

<llo_original>
// kernel: tpu_custom_call.1
$region0: #{tpu_custom_call.1}
  #allocation0 [shape = 'u32[]', space=smem, size = 0x4, offset = 0x4, fixed_abs, tag = 'smem constant byte address 0x4 - core index']
  #allocation1 [shape = 'u32[144,128]{1,0:T(1,128)}', space=vmem, size = 0x12000, scoped, tag = 'internal scratch']
  %s0 = inlined_call_operand.hbm [shape: f32[256,128], index: 0, kind: input, shape index: {}]
  %s1 = inlined_call_operand.hbm [shape: bf16[128,128], index: 1, kind: input, shape index: {}]
  %s2 = inlined_call_operand.vmem [shape: f32[1,128], index: 2, kind: input, shape index: {}]
  %s3 = inlined_call_operand.vmem [shape: f32[1,128], index: 3, kind: input, shape index: {}]
  %s4 = inlined_call_operand.vmem [shape: f32[1,128], index: 4, kind: input, shape index: {}]
  %s5 = inlined_call_operand.hbm [shape: f32[256,128], index: 5, kind: output, shape index: {}]
  %s6 = sld [smem:[#allocation0]]
  $region61: #{tpu_custom_call.1} parent=0
    _
  %s8 = ssub.s32 1, %s6
  %s9 = scalar_select 0, %s8, %s6
  $region1: #{tpu_custom_call.1} parent=0
    #allocation2 [shape = 'u8[131072]{0}', space=vmem, size = 0x20000, scoped, tag = 'input window, operand 0']
    #allocation3 [shape = 's32[2]{0}', space=sflag, size = 0x8, scoped, tag = 'scoped memory for tpu_custom_call.1']
    #allocation4 [shape = 's32[2]{0}', space=sflag, size = 0x8, scoped, tag = 'scoped memory for tpu_custom_call.1']
    #allocation5 [shape = 'u8[32768]{0}', space=vmem, size = 0x8000, scoped, tag = 'input window, operand 1, single buffered']
    #allocation6 [shape = 's32[1]{0}', space=sflag, size = 0x4, scoped, tag = 'scoped memory for tpu_custom_call.1']
    #allocation7 [shape = 'u8[131072]{0}', space=vmem, size = 0x20000, scoped, tag = 'output window, operand 0']
    %10 = vsyncpa [#allocation3], 0
    %s11 = scalar_lea.sflag [#allocation3], 1
    %12 = vsyncpa %s11, 0
    %13 = vsyncpa [#allocation6], 0
    %14 = vsyncpa [#allocation4], 0
    %s15 = scalar_lea.sflag [#allocation4], 1
    %16 = vsyncpa %s15, 0
    loop: start=0, step=1, limit=4
    $region2: #{tpu_custom_call.1} parent=1 // loop_pre_header
      _
    $region3: #{tpu_custom_call.1} parent=1 // loop_header
      %s18 = sphi 0, %s22
      %p19 = scmp.ge.s32.totalorder %s18, 4
      %s28 = sphi 0, %s30
      %s31 = sphi 0, %s28
      %s32 = sphi 0, %s31
      %s48 = sphi 0, %s32
      %s52 = sphi 0, %s52
      %s54 = sphi 0, %s52
      %s55 = sphi 0, %s54
      %s69 = sphi 0, %s55
      %s73 = sphi 0, %s73
      %s75 = sphi 0, %s73
      %s76 = sphi 0, %s75
      %s90 = sphi 0, %s76
      %s94 = sphi 0, %s94
      %s96 = sphi 0, %s94
      %s97 = sphi 0, %s96
      %s111 = sphi 0, %s97
      %s115 = sphi 0, %s115
      %s117 = sphi 0, %s115
      %s118 = sphi 0, %s117
      %s132 = sphi 0, %s118
      %s138 = sphi 0, %s140
      %s141 = sphi 0, %s138
      %s142 = sphi 0, %s141
      %s158 = sphi 0, %s142
    $region4: #{tpu_custom_call.1} parent=1 // loop_header_branch
      %21 = sbr.rel (%p19) target = $region8
    $region5: #{tpu_custom_call.1} parent=1 // loop_body
      %s23 = ssub.s32 %s18, 1
      %s24 = ssub.s32 %s18, 2
      %s25 = sadd.s32 %s18, 1
      %s26 = ssub.s32 %s18, %s25
      %p27 = scmp.eq.s32.totalorder %s26, 0
      %s29 = sadd.s32 %s28, 1
      %s30 = scalar_select %p27, %s28, %s29
      %p33 = pneg %p27
      %p34 = scmp.eq.s32.totalorder %s18, 1
      %p35 = por %p33, %p34
      %p36 = scmp.ne.s32.totalorder %s28, %s31
      %p37 = scmp.eq.s32.totalorder %s18, 0
      %p38 = por %p36, %p37
      %p39 = scmp.ne.s32.totalorder %s28, %s31
      %p40 = scmp.eq.s32.totalorder %s23, 1
      %p41 = por %p39, %p40
      %p42 = scmp.ne.s32.totalorder %s31, %s32
      %p43 = scmp.eq.s32.totalorder %s23, 0
      %p44 = por %p42, %p43
      %p45 = scmp.ne.s32.totalorder %s31, %s32
      %p46 = scmp.eq.s32.totalorder %s24, 1
      %p47 = por %p45, %p46
      %p49 = scmp.ne.s32.totalorder %s32, %s48
      %p50 = scmp.eq.s32.totalorder %s24, 0
      %p51 = por %p49, %p50
      %s53 = sadd.s32 %s52, 1
      %p56 = scmp.eq.s32.totalorder %s18, 1
      %p57 = scmp.ne.s32.totalorder %s52, %s54
      %p58 = scmp.eq.s32.totalorder %s18, 0
      %p59 = por %p57, %p58
      %p60 = scmp.ne.s32.totalorder %s52, %s54
      %p61 = scmp.eq.s32.totalorder %s23, 1
      %p62 = por %p60, %p61
      %p63 = scmp.ne.s32.totalorder %s54, %s55
      %p64 = scmp.eq.s32.totalorder %s23, 0
      %p65 = por %p63, %p64
      %p66 = scmp.ne.s32.totalorder %s54, %s55
      %p67 = scmp.eq.s32.totalorder %s24, 1
      %p68 = por %p66, %p67
      %p70 = scmp.ne.s32.totalorder %s55, %s69
      %p71 = scmp.eq.s32.totalorder %s24, 0
      %p72 = por %p70, %p71
      %s74 = sadd.s32 %s73, 1
      %p77 = scmp.eq.s32.totalorder %s18, 1
      %p78 = scmp.ne.s32.totalorder %s73, %s75
      %p79 = scmp.eq.s32.totalorder %s18, 0
      %p80 = por %p78, %p79
      %p81 = scmp.ne.s32.totalorder %s73, %s75
      %p82 = scmp.eq.s32.totalorder %s23, 1
      %p83 = por %p81, %p82
      %p84 = scmp.ne.s32.totalorder %s75, %s76
      %p85 = scmp.eq.s32.totalorder %s23, 0
      %p86 = por %p84, %p85
      %p87 = scmp.ne.s32.totalorder %s75, %s76
      %p88 = scmp.eq.s32.totalorder %s24, 1
      %p89 = por %p87, %p88
      %p91 = scmp.ne.s32.totalorder %s76, %s90
      %p92 = scmp.eq.s32.totalorder %s24, 0
      %p93 = por %p91, %p92
      %s95 = sadd.s32 %s94, 1
      %p98 = scmp.eq.s32.totalorder %s18, 1
      %p99 = scmp.ne.s32.totalorder %s94, %s96
      %p100 = scmp.eq.s32.totalorder %s18, 0
      %p101 = por %p99, %p100
      %p102 = scmp.ne.s32.totalorder %s94, %s96
      %p103 = scmp.eq.s32.totalorder %s23, 1
      %p104 = por %p102, %p103
      %p105 = scmp.ne.s32.totalorder %s96, %s97
      %p106 = scmp.eq.s32.totalorder %s23, 0
      %p107 = por %p105, %p106
      %p108 = scmp.ne.s32.totalorder %s96, %s97
      %p109 = scmp.eq.s32.totalorder %s24, 1
      %p110 = por %p108, %p109
      %p112 = scmp.ne.s32.totalorder %s97, %s111
      %p113 = scmp.eq.s32.totalorder %s24, 0
      %p114 = por %p112, %p113
      %s116 = sadd.s32 %s115, 1
      %p119 = scmp.eq.s32.totalorder %s18, 1
      %p120 = scmp.ne.s32.totalorder %s115, %s117
      %p121 = scmp.eq.s32.totalorder %s18, 0
      %p122 = por %p120, %p121
      %p123 = scmp.ne.s32.totalorder %s115, %s117
      %p124 = scmp.eq.s32.totalorder %s23, 1
      %p125 = por %p123, %p124
      %p126 = scmp.ne.s32.totalorder %s117, %s118
      %p127 = scmp.eq.s32.totalorder %s23, 0
      %p128 = por %p126, %p127
      %p129 = scmp.ne.s32.totalorder %s117, %s118
      %p130 = scmp.eq.s32.totalorder %s24, 1
      %p131 = por %p129, %p130
      %p133 = scmp.ne.s32.totalorder %s118, %s132
      %p134 = scmp.eq.s32.totalorder %s24, 0
      %p135 = por %p133, %p134
      %s136 = ssub.s32 %s18, %s25
      %p137 = scmp.eq.s32.totalorder %s136, 0
      %s139 = sadd.s32 %s138, 1
      %s140 = scalar_select %p137, %s138, %s139
      %p143 = pneg %p137
      %p144 = scmp.eq.s32.totalorder %s18, 1
      %p145 = por %p143, %p144
      %p146 = scmp.ne.s32.totalorder %s138, %s141
      %p147 = scmp.eq.s32.totalorder %s18, 0
      %p148 = por %p146, %p147
      %p149 = scmp.ne.s32.totalorder %s138, %s141
      %p150 = scmp.eq.s32.totalorder %s23, 1
      %p151 = por %p149, %p150
      %p152 = scmp.ne.s32.totalorder %s141, %s142
      %p153 = scmp.eq.s32.totalorder %s23, 0
      %p154 = por %p152, %p153
      %p155 = scmp.ne.s32.totalorder %s141, %s142
      %p156 = scmp.eq.s32.totalorder %s24, 1
      %p157 = por %p155, %p156
      %p159 = scmp.ne.s32.totalorder %s142, %s158
      %p160 = scmp.eq.s32.totalorder %s24, 0
      %p161 = por %p159, %p160
      %p162 = scmp.le.s32.totalorder 1, %s18
      %p163 = scmp.lt.s32.totalorder %s18, 3
      %p164 = pnand %p162, %p163
      %p165 = pneg %p164
      // Predicated region
      $region9: #{tpu_custom_call.1} parent=5 // pred_check
        _
      $region10: #{tpu_custom_call.1} parent=5 // pred_check_branch
        %167 = sbr.rel (%p164) target = $region12
      $region11: #{tpu_custom_call.1} parent=5 // pred_region
        %s168 = ssub.s32 %s18, 1
        // Predicated region
        $region13: #{tpu_custom_call.1} parent=11 // pred_check
          %p169 = pneg %p65
        $region14: #{tpu_custom_call.1} parent=11 // pred_check_branch
          %171 = sbr.rel (%p169) target = $region16
        $region15: #{tpu_custom_call.1} parent=11 // pred_region
          %s173 = ssub.s32 1024, 1024
          %174 = vsyncadd [#allocation6], %s173
          %s175 = sshll.u32 [#allocation5], 4
          %s176 = int_to_ptr.vmem [resolvable:$true] %s175
          %181 = dma.hbm_to_vmem [thread:$0]  %s1, 1024, %s176, [#allocation6], 64, 64, 4
        $region16: #{tpu_custom_call.1} parent=11 // pred_fallthru
          _
        // Predicated region
        $region17: #{tpu_custom_call.1} parent=11 // pred_check
          %p182 = pneg %p86
        $region18: #{tpu_custom_call.1} parent=11 // pred_check_branch
          %184 = sbr.rel (%p182) target = $region20
        $region19: #{tpu_custom_call.1} parent=11 // pred_region
          _
        $region20: #{tpu_custom_call.1} parent=11 // pred_fallthru
          _
        // Predicated region
        $region21: #{tpu_custom_call.1} parent=11 // pred_check
          %p185 = pneg %p107
        $region22: #{tpu_custom_call.1} parent=11 // pred_check_branch
          %187 = sbr.rel (%p185) target = $region24
        $region23: #{tpu_custom_call.1} parent=11 // pred_region
          _
        $region24: #{tpu_custom_call.1} parent=11 // pred_fallthru
          _
        // Predicated region
        $region25: #{tpu_custom_call.1} parent=11 // pred_check
          %p188 = pneg %p128
        $region26: #{tpu_custom_call.1} parent=11 // pred_check_branch
          %190 = sbr.rel (%p188) target = $region28
        $region27: #{tpu_custom_call.1} parent=11 // pred_region
          _
        $region28: #{tpu_custom_call.1} parent=11 // pred_fallthru
          _
      $region12: #{tpu_custom_call.1} parent=5 // pred_fallthru
        _
      %p191 = scmp.lt.s32.totalorder %s18, 2
      // Predicated region
      $region29: #{tpu_custom_call.1} parent=5 // pred_check
        %p192 = pneg %p191
      $region30: #{tpu_custom_call.1} parent=5 // pred_check_branch
        %194 = sbr.rel (%p192) target = $region32
      $region31: #{tpu_custom_call.1} parent=5 // pred_region
        // Predicated region
        $region33: #{tpu_custom_call.1} parent=31 // pred_check
          %p195 = pneg %p38
        $region34: #{tpu_custom_call.1} parent=31 // pred_check_branch
          %197 = sbr.rel (%p195) target = $region36
        $region35: #{tpu_custom_call.1} parent=31 // pred_region
          %s198 = sand.u32 %s28, 1
          %s199 = scalar_lea.sflag [#allocation3], %s198
          %s200 = sand.u32 %s28, 1
          %s201 = smul.addr %s200, 128
          %s202 = scalar_lea.vmem [#allocation2], %s201
          %s203 = smul.u32 16, %s18
          %s205 = ssub.s32 2048, 2048
          %206 = vsyncadd %s199, %s205
          %s207 = smul.addr %s203, 128
          %s208 = scalar_lea.hbm %s0, %s207
          %s209 = sshll.u32 %s202, 4
          %s210 = int_to_ptr.vmem [resolvable:$true] %s209
          %215 = dma.hbm_to_vmem [thread:$0]  %s208, 2048, %s210, %s199, 128, 128, 8
        $region36: #{tpu_custom_call.1} parent=31 // pred_fallthru
          _
      $region32: #{tpu_custom_call.1} parent=5 // pred_fallthru
        _
      %p216 = scmp.le.s32.totalorder 1, %s18
      %p217 = scmp.lt.s32.totalorder %s18, 3
      %p218 = pnand %p216, %p217
      %p219 = pneg %p218
      // Predicated region
      $region37: #{tpu_custom_call.1} parent=5 // pred_check
        _
      $region38: #{tpu_custom_call.1} parent=5 // pred_check_branch
        %221 = sbr.rel (%p218) target = $region40
      $region39: #{tpu_custom_call.1} parent=5 // pred_region
        %s222 = ssub.s32 %s18, 1
        %s223 = sand.u32 %s31, 1
        %s224 = scalar_lea.sflag [#allocation3], %s223
        %s225 = sand.u32 %s31, 1
        %s226 = smul.addr %s225, 128
        %s227 = scalar_lea.vmem [#allocation2], %s226
        // Predicated region
        $region41: #{tpu_custom_call.1} parent=39 // pred_check
          %p228 = pneg %p44
        $region42: #{tpu_custom_call.1} parent=39 // pred_check_branch
          %230 = sbr.rel (%p228) target = $region44
        $region43: #{tpu_custom_call.1} parent=39 // pred_region
          %231 = dma.done %s224, 2048
        $region44: #{tpu_custom_call.1} parent=39 // pred_fallthru
          _
        // Predicated region
        $region45: #{tpu_custom_call.1} parent=39 // pred_check
          %p232 = pneg %p65
        $region46: #{tpu_custom_call.1} parent=39 // pred_check_branch
          %234 = sbr.rel (%p232) target = $region48
        $region47: #{tpu_custom_call.1} parent=39 // pred_region
          %235 = dma.done [#allocation6], 1024
        $region48: #{tpu_custom_call.1} parent=39 // pred_fallthru
          _
        %s236 = sand.u32 %s31, 1
        %s237 = scalar_lea.sflag [#allocation3], %s236
        %s238 = sand.u32 %s31, 1
        %s239 = smul.addr %s238, 128
        %s240 = scalar_lea.vmem [#allocation2], %s239
        %p241 = pneg %p44
        %p242 = pneg %p41
        %p243 = pneg %p65
        %p244 = pneg %p62
        %p245 = pneg %p86
        %p246 = pneg %p83
        %p247 = pneg %p107
        %p248 = pneg %p104
        %p249 = pneg %p128
        %p250 = pneg %p125
        %p251 = pneg %p154
        %p252 = pneg %p151
        %s253 = sand.u32 %s141, 1
        %s254 = scalar_lea.sflag [#allocation4], %s253
        %s255 = sand.u32 %s141, 1
        %s256 = smul.addr %s255, 128
        %s257 = scalar_lea.vmem [#allocation7], %s256
        %s258 = smul.u32 16, %s23
        %s259 = smul.u32 16, %s23
        %v261 = vld [vmem:[%s227] sm:$0xff]
        %v262 = vld [vmem:[%s227 + $0x8] sm:$0xff]
        %v263 = vld [vmem:[%s227 + $0x10] sm:$0xff]
        %v264 = vld [vmem:[%s227 + $0x18] sm:$0xff]
        %v265 = vld [vmem:[%s227 + $0x20] sm:$0xff]
        %v266 = vld [vmem:[%s227 + $0x28] sm:$0xff]
        %v267 = vld [vmem:[%s227 + $0x30] sm:$0xff]
        %v268 = vld [vmem:[%s227 + $0x38] sm:$0xff]
        %v269 = vld [vmem:[%s227 + $0x40] sm:$0xff]
        %v270 = vld [vmem:[%s227 + $0x48] sm:$0xff]
        %v271 = vld [vmem:[%s227 + $0x50] sm:$0xff]
        %v272 = vld [vmem:[%s227 + $0x58] sm:$0xff]
        %v273 = vld [vmem:[%s227 + $0x60] sm:$0xff]
        %v274 = vld [vmem:[%s227 + $0x68] sm:$0xff]
        %v275 = vld [vmem:[%s227 + $0x70] sm:$0xff]
        %v276 = vld [vmem:[%s227 + $0x78] sm:$0xff]
        %v277 = vpack.c.bf16 %v262, %v261
        %v278 = vpack.c.bf16 %v264, %v263
        %v279 = vpack.c.bf16 %v266, %v265
        %v280 = vpack.c.bf16 %v268, %v267
        %v281 = vpack.c.bf16 %v270, %v269
        %v282 = vpack.c.bf16 %v272, %v271
        %v283 = vpack.c.bf16 %v274, %v273
        %v284 = vpack.c.bf16 %v276, %v275
        %v285 = vld [vmem:[#allocation5] sm:$0xf]
        %v286 = vld [vmem:[#allocation5 + $0x4] sm:$0xf]
        %v287 = vld [vmem:[#allocation5 + $0x8] sm:$0xf]
        %v288 = vld [vmem:[#allocation5 + $0xc] sm:$0xf]
        %v289 = vld [vmem:[#allocation5 + $0x10] sm:$0xf]
        %v290 = vld [vmem:[#allocation5 + $0x14] sm:$0xf]
        %v291 = vld [vmem:[#allocation5 + $0x18] sm:$0xf]
        %v292 = vld [vmem:[#allocation5 + $0x1c] sm:$0xf]
        %v293 = vld [vmem:[#allocation5 + $0x20] sm:$0xf]
        %v294 = vld [vmem:[#allocation5 + $0x24] sm:$0xf]
        %v295 = vld [vmem:[#allocation5 + $0x28] sm:$0xf]
        %v296 = vld [vmem:[#allocation5 + $0x2c] sm:$0xf]
        %v297 = vld [vmem:[#allocation5 + $0x30] sm:$0xf]
        %v298 = vld [vmem:[#allocation5 + $0x34] sm:$0xf]
        %v299 = vld [vmem:[#allocation5 + $0x38] sm:$0xf]
        %v300 = vld [vmem:[#allocation5 + $0x3c] sm:$0xf]
        %v301 = vld [vmem:[%s2] sm:$0x1]
        %v303 = vlaneseq
        %v304 = vshrl.u32 %v303, 7
        %v305 = vsub.s32 0, %v304
        %v306 = vrot.slane %v301, %v305
        %v324 = vunpack.c.l.b16 %v285
        %v325 = vunpack.c.l.b16 %v286
        %v326 = vunpack.c.l.b16 %v287
        %v327 = vunpack.c.l.b16 %v288
        %v328 = vunpack.c.l.b16 %v289
        %v329 = vunpack.c.l.b16 %v290
        %v330 = vunpack.c.l.b16 %v291
        %v331 = vunpack.c.l.b16 %v292
        %v332 = vunpack.c.l.b16 %v293
        %v333 = vunpack.c.l.b16 %v294
        %v334 = vunpack.c.l.b16 %v295
        %v335 = vunpack.c.l.b16 %v296
        %v336 = vunpack.c.l.b16 %v297
        %v337 = vunpack.c.l.b16 %v298
        %v338 = vunpack.c.l.b16 %v299
        %v339 = vunpack.c.l.b16 %v300
        %v340 = vpack.c.b16 %v325, %v324
        %v341 = vpack.c.b16 %v327, %v326
        %v342 = vpack.c.b16 %v329, %v328
        %v343 = vpack.c.b16 %v331, %v330
        %v344 = vpack.c.b16 %v333, %v332
        %v345 = vpack.c.b16 %v335, %v334
        %v346 = vpack.c.b16 %v337, %v336
        %v347 = vpack.c.b16 %v339, %v338
        %356 = vmatprep.subr.bf16.mxu0 0
        %357 = vmatpush1.bf16.msra.mxu0 %v340
        %358 = vmatprep.subr.bf16.mxu0 0
        %359 = vmatpush1.bf16.msra.mxu0 %v341
        %360 = vmatprep.subr.bf16.mxu0 0
        %361 = vmatpush1.bf16.msra.mxu0 %v342
        %362 = vmatprep.subr.bf16.mxu0 0
        %363 = vmatpush1.bf16.msra.mxu0 %v343
        %364 = vmatprep.subr.bf16.mxu0 0
        %365 = vmatpush1.bf16.msra.mxu0 %v344
        %366 = vmatprep.subr.bf16.mxu0 0
        %367 = vmatpush1.bf16.msra.mxu0 %v345
        %368 = vmatprep.subr.bf16.mxu0 0
        %369 = vmatpush1.bf16.msra.mxu0 %v346
        %370 = vmatprep.subr.bf16.mxu0 0
        %371 = vmatpush1.bf16.msra.mxu0 %v347
        %372 = vmatprep.subr.bf16.mxu0 0
        %373 = vmatpush1.bf16.msra.mxu0 0
        %374 = vmatprep.subr.bf16.mxu0 0
        %375 = vmatpush1.bf16.msra.mxu0 0
        %376 = vmatprep.subr.bf16.mxu0 0
        %377 = vmatpush1.bf16.msra.mxu0 0
        %378 = vmatprep.subr.bf16.mxu0 0
        %379 = vmatpush1.bf16.msra.mxu0 0
        %380 = vmatprep.subr.bf16.mxu0 0
        %381 = vmatpush1.bf16.msra.mxu0 0
        %382 = vmatprep.subr.bf16.mxu0 0
        %383 = vmatpush1.bf16.msra.mxu0 0
        %384 = vmatprep.subr.bf16.mxu0 0
        %385 = vmatpush1.bf16.msra.mxu0 0
        %386 = vmatprep.subr.bf16.mxu0 0
        %387 = vmatpush1.bf16.msra.mxu0 0
        %388 = vmatprep.mubr.bf16.mxu0 0
        %389 = vmatmul.mubr.bf16.gmra.mrb[0].mxu0 %v277
        %v390 = vpop.f32.mrb[0].mxu0
        %v391 = vadd.f32 %v306, %v390
        %v392 = vpop.f32.mrb[0].mxu0
        %v393 = vpop.f32.mrb[0].mxu0
        %v394 = vadd.f32 %v306, %v393
        %v395 = vpop.f32.mrb[0].mxu0
        %396 = vmatprep.mubr.bf16.mxu0 0
        %397 = vmatmul.mubr.bf16.gmra.mrb[0].mxu0 %v278
        %v398 = vpop.f32.mrb[0].mxu0
        %v399 = vadd.f32 %v306, %v398
        %v400 = vpop.f32.mrb[0].mxu0
        %v401 = vpop.f32.mrb[0].mxu0
        %v402 = vadd.f32 %v306, %v401
        %v403 = vpop.f32.mrb[0].mxu0
        %404 = vmatprep.mubr.bf16.mxu0 0
        %405 = vmatmul.mubr.bf16.gmra.mrb[0].mxu0 %v279
        %v406 = vpop.f32.mrb[0].mxu0
        %v407 = vadd.f32 %v306, %v406
        %v408 = vpop.f32.mrb[0].mxu0
        %v409 = vpop.f32.mrb[0].mxu0
        %v410 = vadd.f32 %v306, %v409
        %v411 = vpop.f32.mrb[0].mxu0
        %412 = vmatprep.mubr.bf16.mxu0 0
        %413 = vmatmul.mubr.bf16.gmra.mrb[0].mxu0 %v280
        %v414 = vpop.f32.mrb[0].mxu0
        %v415 = vadd.f32 %v306, %v414
        %v416 = vpop.f32.mrb[0].mxu0
        %v417 = vpop.f32.mrb[0].mxu0
        %v418 = vadd.f32 %v306, %v417
        %v419 = vpop.f32.mrb[0].mxu0
        %420 = vmatprep.mubr.bf16.mxu0 0
        %421 = vmatmul.mubr.bf16.gmra.mrb[0].mxu0 %v281
        %v422 = vpop.f32.mrb[0].mxu0
        %v423 = vadd.f32 %v306, %v422
        %v424 = vpop.f32.mrb[0].mxu0
        %v425 = vpop.f32.mrb[0].mxu0
        %v426 = vadd.f32 %v306, %v425
        %v427 = vpop.f32.mrb[0].mxu0
        %428 = vmatprep.mubr.bf16.mxu0 0
        %429 = vmatmul.mubr.bf16.gmra.mrb[0].mxu0 %v282
        %v430 = vpop.f32.mrb[0].mxu0
        %v431 = vadd.f32 %v306, %v430
        %v432 = vpop.f32.mrb[0].mxu0
        %v433 = vpop.f32.mrb[0].mxu0
        %v434 = vadd.f32 %v306, %v433
        %v435 = vpop.f32.mrb[0].mxu0
        %436 = vmatprep.mubr.bf16.mxu0 0
        %437 = vmatmul.mubr.bf16.gmra.mrb[0].mxu0 %v283
        %v438 = vpop.f32.mrb[0].mxu0
        %v439 = vadd.f32 %v306, %v438
        %v440 = vpop.f32.mrb[0].mxu0
        %v441 = vpop.f32.mrb[0].mxu0
        %v442 = vadd.f32 %v306, %v441
        %v443 = vpop.f32.mrb[0].mxu0
        %444 = vmatprep.mubr.bf16.mxu0 0
        %445 = vmatmul.mubr.bf16.gmra.mrb[0].mxu0 %v284
        %v446 = vpop.f32.mrb[0].mxu0
        %v447 = vadd.f32 %v306, %v446
        %v448 = vpop.f32.mrb[0].mxu0
        %v449 = vpop.f32.mrb[0].mxu0
        %v450 = vadd.f32 %v306, %v449
        %v451 = vpop.f32.mrb[0].mxu0
        %452 = vdwg.mxu0
        %453 = vadd.xlane.f32.xlu0 %v391
        %v454 = vpop.xlane.xlu0 %453
        %455 = vadd.xlane.f32.xlu0 %v394
        %v456 = vpop.xlane.xlu0 %455
        %457 = vadd.xlane.f32.xlu0 %v399
        %v458 = vpop.xlane.xlu0 %457
        %459 = vadd.xlane.f32.xlu0 %v402
        %v460 = vpop.xlane.xlu0 %459
        %461 = vadd.xlane.f32.xlu0 %v407
        %v462 = vpop.xlane.xlu0 %461
        %463 = vadd.xlane.f32.xlu0 %v410
        %v464 = vpop.xlane.xlu0 %463
        %465 = vadd.xlane.f32.xlu0 %v415
        %v466 = vpop.xlane.xlu0 %465
        %467 = vadd.xlane.f32.xlu0 %v418
        %v468 = vpop.xlane.xlu0 %467
        %469 = vadd.xlane.f32.xlu0 %v423
        %v470 = vpop.xlane.xlu0 %469
        %471 = vadd.xlane.f32.xlu0 %v426
        %v472 = vpop.xlane.xlu0 %471
        %473 = vadd.xlane.f32.xlu0 %v431
        %v474 = vpop.xlane.xlu0 %473
        %475 = vadd.xlane.f32.xlu0 %v434
        %v476 = vpop.xlane.xlu0 %475
        %477 = vadd.xlane.f32.xlu0 %v439
        %v478 = vpop.xlane.xlu0 %477
        %479 = vadd.xlane.f32.xlu0 %v442
        %v480 = vpop.xlane.xlu0 %479
        %481 = vadd.xlane.f32.xlu0 %v447
        %v482 = vpop.xlane.xlu0 %481
        %483 = vadd.xlane.f32.xlu0 %v450
        %v484 = vpop.xlane.xlu0 %483
        %v485 = vrcp.pop 128.0
        %v486 = vmul.f32 %v454, %v485
        %v487 = vmul.f32 %v456, %v485
        %v488 = vmul.f32 %v458, %v485
        %v489 = vmul.f32 %v460, %v485
        %v490 = vmul.f32 %v462, %v485
        %v491 = vmul.f32 %v464, %v485
        %v492 = vmul.f32 %v466, %v485
        %v493 = vmul.f32 %v468, %v485
        %v494 = vmul.f32 %v470, %v485
        %v495 = vmul.f32 %v472, %v485
        %v496 = vmul.f32 %v474, %v485
        %v497 = vmul.f32 %v476, %v485
        %v498 = vmul.f32 %v478, %v485
        %v499 = vmul.f32 %v480, %v485
        %v500 = vmul.f32 %v482, %v485
        %v501 = vmul.f32 %v484, %v485
        %v502 = vsub.f32 %v391, %v486
        %v503 = vsub.f32 %v394, %v487
        %v504 = vsub.f32 %v399, %v488
        %v505 = vsub.f32 %v402, %v489
        %v506 = vsub.f32 %v407, %v490
        %v507 = vsub.f32 %v410, %v491
        %v508 = vsub.f32 %v415, %v492
        %v509 = vsub.f32 %v418, %v493
        %v510 = vsub.f32 %v423, %v494
        %v511 = vsub.f32 %v426, %v495
        %v512 = vsub.f32 %v431, %v496
        %v513 = vsub.f32 %v434, %v497
        %v514 = vsub.f32 %v439, %v498
        %v515 = vsub.f32 %v442, %v499
        %v516 = vsub.f32 %v447, %v500
        %v517 = vsub.f32 %v450, %v501
        %v518 = vmul.f32 %v502, %v502
        %v519 = vmul.f32 %v503, %v503
        %v520 = vmul.f32 %v504, %v504
        %v521 = vmul.f32 %v505, %v505
        %v522 = vmul.f32 %v506, %v506
        %v523 = vmul.f32 %v507, %v507
        %v524 = vmul.f32 %v508, %v508
        %v525 = vmul.f32 %v509, %v509
        %v526 = vmul.f32 %v510, %v510
        %v527 = vmul.f32 %v511, %v511
        %v528 = vmul.f32 %v512, %v512
        %v529 = vmul.f32 %v513, %v513
        %v530 = vmul.f32 %v514, %v514
        %v531 = vmul.f32 %v515, %v515
        %v532 = vmul.f32 %v516, %v516
        %v533 = vmul.f32 %v517, %v517
        %534 = vadd.xlane.f32.xlu0 %v518
        %v535 = vpop.xlane.xlu0 %534
        %536 = vadd.xlane.f32.xlu0 %v519
        %v537 = vpop.xlane.xlu0 %536
        %538 = vadd.xlane.f32.xlu0 %v520
        %v539 = vpop.xlane.xlu0 %538
        %540 = vadd.xlane.f32.xlu0 %v521
        %v541 = vpop.xlane.xlu0 %540
        %542 = vadd.xlane.f32.xlu0 %v522
        %v543 = vpop.xlane.xlu0 %542
        %544 = vadd.xlane.f32.xlu0 %v523
        %v545 = vpop.xlane.xlu0 %544
        %546 = vadd.xlane.f32.xlu0 %v524
        %v547 = vpop.xlane.xlu0 %546
        %548 = vadd.xlane.f32.xlu0 %v525
        %v549 = vpop.xlane.xlu0 %548
        %550 = vadd.xlane.f32.xlu0 %v526
        %v551 = vpop.xlane.xlu0 %550
        %552 = vadd.xlane.f32.xlu0 %v527
        %v553 = vpop.xlane.xlu0 %552
        %554 = vadd.xlane.f32.xlu0 %v528
        %v555 = vpop.xlane.xlu0 %554
        %556 = vadd.xlane.f32.xlu0 %v529
        %v557 = vpop.xlane.xlu0 %556
        %558 = vadd.xlane.f32.xlu0 %v530
        %v559 = vpop.xlane.xlu0 %558
        %560 = vadd.xlane.f32.xlu0 %v531
        %v561 = vpop.xlane.xlu0 %560
        %562 = vadd.xlane.f32.xlu0 %v532
        %v563 = vpop.xlane.xlu0 %562
        %564 = vadd.xlane.f32.xlu0 %v533
        %v565 = vpop.xlane.xlu0 %564
        %v566 = vmul.f32 %v535, %v485
        %v567 = vmul.f32 %v537, %v485
        %v568 = vmul.f32 %v539, %v485
        %v569 = vmul.f32 %v541, %v485
        %v570 = vmul.f32 %v543, %v485
        %v571 = vmul.f32 %v545, %v485
        %v572 = vmul.f32 %v547, %v485
        %v573 = vmul.f32 %v549, %v485
        %v574 = vmul.f32 %v551, %v485
        %v575 = vmul.f32 %v553, %v485
        %v576 = vmul.f32 %v555, %v485
        %v577 = vmul.f32 %v557, %v485
        %v578 = vmul.f32 %v559, %v485
        %v579 = vmul.f32 %v561, %v485
        %v580 = vmul.f32 %v563, %v485
        %v581 = vmul.f32 %v565, %v485
        %v582 = vadd.f32 %v566, 1e-05
        %v583 = vadd.f32 %v567, 1e-05
        %v584 = vadd.f32 %v568, 1e-05
        %v585 = vadd.f32 %v569, 1e-05
        %v586 = vadd.f32 %v570, 1e-05
        %v587 = vadd.f32 %v571, 1e-05
        %v588 = vadd.f32 %v572, 1e-05
        %v589 = vadd.f32 %v573, 1e-05
        %v590 = vadd.f32 %v574, 1e-05
        %v591 = vadd.f32 %v575, 1e-05
        %v592 = vadd.f32 %v576, 1e-05
        %v593 = vadd.f32 %v577, 1e-05
        %v594 = vadd.f32 %v578, 1e-05
        %v595 = vadd.f32 %v579, 1e-05
        %v596 = vadd.f32 %v580, 1e-05
        %v597 = vadd.f32 %v581, 1e-05
        %v598 = vrsqrt.pop %v582
        %v599 = vrsqrt.pop %v583
        %v600 = vrsqrt.pop %v584
        %v601 = vrsqrt.pop %v585
        %v602 = vrsqrt.pop %v586
        %v603 = vrsqrt.pop %v587
        %v604 = vrsqrt.pop %v588
        %v605 = vrsqrt.pop %v589
        %v606 = vrsqrt.pop %v590
        %v607 = vrsqrt.pop %v591
        %v608 = vrsqrt.pop %v592
        %v609 = vrsqrt.pop %v593
        %v610 = vrsqrt.pop %v594
        %v611 = vrsqrt.pop %v595
        %v612 = vrsqrt.pop %v596
        %v613 = vrsqrt.pop %v597
        %v614 = vmul.f32 %v502, %v598
        %v615 = vmul.f32 %v503, %v599
        %v616 = vmul.f32 %v504, %v600
        %v617 = vmul.f32 %v505, %v601
        %v618 = vmul.f32 %v506, %v602
        %v619 = vmul.f32 %v507, %v603
        %v620 = vmul.f32 %v508, %v604
        %v621 = vmul.f32 %v509, %v605
        %v622 = vmul.f32 %v510, %v606
        %v623 = vmul.f32 %v511, %v607
        %v624 = vmul.f32 %v512, %v608
        %v625 = vmul.f32 %v513, %v609
        %v626 = vmul.f32 %v514, %v610
        %v627 = vmul.f32 %v515, %v611
        %v628 = vmul.f32 %v516, %v612
        %v629 = vmul.f32 %v517, %v613
        %v630 = vld [vmem:[%s3] sm:$0x1]
        %v632 = vlaneseq
        %v633 = vshrl.u32 %v632, 7
        %v634 = vsub.s32 0, %v633
        %v635 = vrot.slane %v630, %v634
        %v637 = vmul.f32 %v614, %v635
        %v638 = vmul.f32 %v615, %v635
        %v639 = vmul.f32 %v616, %v635
        %v640 = vmul.f32 %v617, %v635
        %v641 = vmul.f32 %v618, %v635
        %v642 = vmul.f32 %v619, %v635
        %v643 = vmul.f32 %v620, %v635
        %v644 = vmul.f32 %v621, %v635
        %v645 = vmul.f32 %v622, %v635
        %v646 = vmul.f32 %v623, %v635
        %v647 = vmul.f32 %v624, %v635
        %v648 = vmul.f32 %v625, %v635
        %v649 = vmul.f32 %v626, %v635
        %v650 = vmul.f32 %v627, %v635
        %v651 = vmul.f32 %v628, %v635
        %v652 = vmul.f32 %v629, %v635
        %v653 = vld [vmem:[%s4] sm:$0x1]
        %v655 = vlaneseq
        %v656 = vshrl.u32 %v655, 7
        %v657 = vsub.s32 0, %v656
        %v658 = vrot.slane %v653, %v657
        %v660 = vadd.f32 %v637, %v658
        %v661 = vadd.f32 %v638, %v658
        %v662 = vadd.f32 %v639, %v658
        %v663 = vadd.f32 %v640, %v658
        %v664 = vadd.f32 %v641, %v658
        %v665 = vadd.f32 %v642, %v658
        %v666 = vadd.f32 %v643, %v658
        %v667 = vadd.f32 %v644, %v658
        %v668 = vadd.f32 %v645, %v658
        %v669 = vadd.f32 %v646, %v658
        %v670 = vadd.f32 %v647, %v658
        %v671 = vadd.f32 %v648, %v658
        %v672 = vadd.f32 %v649, %v658
        %v673 = vadd.f32 %v650, %v658
        %v674 = vadd.f32 %v651, %v658
        %v675 = vadd.f32 %v652, %v658
        %676 = vst [vmem:[%s257] sm:$0xff] %v660
        %677 = vst [vmem:[%s257 + $0x8] sm:$0xff] %v661
        %678 = vst [vmem:[%s257 + $0x10] sm:$0xff] %v662
        %679 = vst [vmem:[%s257 + $0x18] sm:$0xff] %v663
        %680 = vst [vmem:[%s257 + $0x20] sm:$0xff] %v664
        %681 = vst [vmem:[%s257 + $0x28] sm:$0xff] %v665
        %682 = vst [vmem:[%s257 + $0x30] sm:$0xff] %v666
        %683 = vst [vmem:[%s257 + $0x38] sm:$0xff] %v667
        %684 = vst [vmem:[%s257 + $0x40] sm:$0xff] %v668
        %685 = vst [vmem:[%s257 + $0x48] sm:$0xff] %v669
        %686 = vst [vmem:[%s257 + $0x50] sm:$0xff] %v670
        %687 = vst [vmem:[%s257 + $0x58] sm:$0xff] %v671
        %688 = vst [vmem:[%s257 + $0x60] sm:$0xff] %v672
        %689 = vst [vmem:[%s257 + $0x68] sm:$0xff] %v673
        %690 = vst [vmem:[%s257 + $0x70] sm:$0xff] %v674
        %691 = vst [vmem:[%s257 + $0x78] sm:$0xff] %v675
        %s692 = sand.u32 %s141, 1
        %s693 = scalar_lea.sflag [#allocation4], %s692
        %s694 = sand.u32 %s141, 1
        %s695 = smul.addr %s694, 128
        %s696 = scalar_lea.vmem [#allocation7], %s695
        // Predicated region
        $region49: #{tpu_custom_call.1} parent=39 // pred_check
          %p697 = pneg %p151
        $region50: #{tpu_custom_call.1} parent=39 // pred_check_branch
          %699 = sbr.rel (%p697) target = $region52
        $region51: #{tpu_custom_call.1} parent=39 // pred_region
          %s700 = smul.u32 16, %s23
          %s702 = ssub.s32 2048, 2048
          %703 = vsyncadd %s693, %s702
          %s704 = smul.addr %s700, 128
          %s705 = scalar_lea.hbm %s5, %s704
          %s706 = sshll.u32 %s696, 4
          %s707 = int_to_ptr.vmem [resolvable:$true] %s706
          %712 = dma.vmem_to_hbm [thread:$0]  %s707, 2048, %s705, %s693, 128, 128, 8
        $region52: #{tpu_custom_call.1} parent=39 // pred_fallthru
          _
      $region40: #{tpu_custom_call.1} parent=5 // pred_fallthru
        _
      %p713 = scmp.le.s32.totalorder 2, %s18
      // Predicated region
      $region53: #{tpu_custom_call.1} parent=5 // pred_check
        %p714 = pneg %p713
      $region54: #{tpu_custom_call.1} parent=5 // pred_check_branch
        %716 = sbr.rel (%p714) target = $region56
      $region55: #{tpu_custom_call.1} parent=5 // pred_region
        %s717 = ssub.s32 %s18, 2
        // Predicated region
        $region57: #{tpu_custom_call.1} parent=55 // pred_check
          %p718 = pneg %p157
        $region58: #{tpu_custom_call.1} parent=55 // pred_check_branch
          %720 = sbr.rel (%p718) target = $region60
        $region59: #{tpu_custom_call.1} parent=55 // pred_region
          %s721 = sand.u32 %s142, 1
          %s722 = scalar_lea.sflag [#allocation4], %s721
          %s723 = sand.u32 %s142, 1
          %s724 = smul.addr %s723, 128
          %s725 = scalar_lea.vmem [#allocation7], %s724
          %726 = dma.done %s722, 2048
        $region60: #{tpu_custom_call.1} parent=55 // pred_fallthru
          _
      $region56: #{tpu_custom_call.1} parent=5 // pred_fallthru
        _
    $region6: #{tpu_custom_call.1} parent=1 // loop_footer
      %s22 = sadd.s32 1, %s18
    $region7: #{tpu_custom_call.1} parent=1 // loop_footer_branch
      %17 = sbr.rel target = $region3
    $region8: #{tpu_custom_call.1} parent=1 // loop_exit
      _
    %727 = vsyncpa [#allocation3], 1
    %s728 = scalar_lea.sflag [#allocation3], 1
    %729 = vsyncpa %s728, 1
    %730 = vsyncpa [#allocation6], 1
    %731 = vsyncpa [#allocation4], 1
    %s732 = scalar_lea.sflag [#allocation4], 1
    %733 = vsyncpa %s732, 1

</llo_original>
